<compile_context>
chip_gen: v5e
topology: v5e:2x2
jax: 0.10.0
libtpu: 0.0.40
codegen_flags: <defaults>
</compile_context>

<pallas_src>
import jax
import jax.numpy as jnp
from jax.experimental import pallas as pl
from jax.experimental.pallas import tpu as pltpu


def _noise_add_kernel(w_ref, img_ref, noise_ref, out_ref):
    # w_ref: SMEM (1,) f32.  img_ref/out_ref: VMEM (1, C_blk, T).  noise_ref: VMEM (1, 1, T).
    img = img_ref[...].astype(jnp.float32)
    noise = noise_ref[...].astype(jnp.float32)
    out_ref[...] = (img + w_ref[0] * noise).astype(out_ref.dtype)


def _noise_gen_kernel(w_ref, seed_ref, img_ref, out_ref):
    # Fused RNG path: synthesize the (1, T) noise tile on-core instead of streaming it
    # from HBM.  The seed depends only on (batch, hw-tile), so every channel block of the
    # same spatial tile regenerates bit-identical noise, i.e. the (B, 1, H, W) broadcast.
    b = pl.program_id(0)
    t = pl.program_id(1)
    pltpu.prng_seed(seed_ref[0] + b * pl.num_programs(1) + t)
    tile = img_ref.shape[-1]
    noise = pltpu.stateful_normal((1, tile), jnp.float32)   # (1, T), broadcast over C_blk
    img = img_ref[...].astype(jnp.float32)
    out_ref[...] = (img + w_ref[0] * noise).astype(out_ref.dtype)


def _tile_sizes(C, HW_pad, itemsize):
    """Pick (T, C_blk, vmem_limit): full-HW rows first, then grow C_blk."""
    try:
        vmem_cap = getattr(pltpu.get_tpu_info(), "vmem_capacity_bytes", 64 * 1024 * 1024)
    except Exception:
        vmem_cap = 64 * 1024 * 1024            # conservative: v7x per-TC figure
    if vmem_cap >= 100 * 1024 * 1024:          # v5e / v6e: 128 MiB physical VMEM
        vmem_limit = 96 * 1024 * 1024
        max_block = 16 * 1024 * 1024
    else:                                      # v7x: 64 MiB physical per TensorCore
        vmem_limit = 48 * 1024 * 1024
        max_block = 8 * 1024 * 1024

    min_cblk = 8 if (C >= 8 and C % 8 == 0) else C
    if HW_pad * min_cblk * itemsize <= max_block:
        T = HW_pad                              # whole rows: contiguous HBM per channel
    else:
        T = max(128, (max_block // (min_cblk * itemsize)) // 128 * 128)

    if C % 8 == 0:
        max_c = max(8, (max_block // (T * itemsize)) // 8 * 8)
        C_blk = min(C, max_c)
    else:
        C_blk = C                               # small / odd channel counts: take them whole
    return T, C_blk, vmem_limit


def noise_injection(image, weight, noise=None, *, key=None, seed=None):
    """out = image + weight * noise, with noise (B,1,H,W) broadcast over channels.

    If `noise` is None it is sampled ~N(0,1): in-kernel via the stateful Pallas PRNG when
    available, otherwise via jax.random.normal in the wrapper.
    """
    B, C, H, W = image.shape
    HW = H * W
    dtype = image.dtype
    itemsize = jnp.dtype(dtype).itemsize

    # Lane padding: every store stays a full, unmasked, lane-dense (128-wide) vst and the
    # block size stays bounded even for HW not divisible by 128.
    HW_pad = ((HW + 127) // 128) * 128
    img2 = image.reshape(B, C, HW)
    if HW_pad != HW:
        img2 = jnp.pad(img2, ((0, 0), (0, 0), (0, HW_pad - HW)))

    T, C_blk, vmem_limit = _tile_sizes(C, HW_pad, itemsize)
    grid = (B, pl.cdiv(HW_pad, T), pl.cdiv(C, C_blk))

    w = jnp.asarray(weight, dtype=jnp.float32).reshape(1)   # scalar weight lives in SMEM

    img_spec = pl.BlockSpec((1, C_blk, T), lambda b, t, c: (b, c, t))
    out_spec = pl.BlockSpec((1, C_blk, T), lambda b, t, c: (b, c, t))
    smem_spec = pl.BlockSpec(memory_space=pltpu.MemorySpace.SMEM)
    out_shape = jax.ShapeDtypeStruct((B, C, HW_pad), dtype)
    compiler_params = pltpu.CompilerParams(
        # All axes "parallel": guarantees 2-TC (megacore) coverage on v7x even for B=1,
        # HW <= T shapes; the noise re-fetch this gives up is ~1/C_blk of total traffic.
        dimension_semantics=("parallel", "parallel", "parallel"),
        vmem_limit_bytes=vmem_limit,
    )
    cost = pl.CostEstimate(
        flops=2 * B * C * HW,
        transcendentals=0,
        bytes_accessed=(2 * B * C * HW + B * HW) * itemsize,
    )

    out = None
    if noise is None and hasattr(pltpu, "stateful_normal"):
        if seed is None:
            seed = (jax.random.randint(key, (), 0, 2**31 - 1, dtype=jnp.int32)
                    if key is not None else 0)
        seed_arr = jnp.asarray(seed, dtype=jnp.int32).reshape(1)
        try:
            out = pl.pallas_call(
                _noise_gen_kernel,
                out_shape=out_shape,
                grid=grid,
                in_specs=[smem_spec, smem_spec, img_spec],
                out_specs=out_spec,
                input_output_aliases={2: 0},        # alias image buffer -> output
                compiler_params=compiler_params,
                cost_estimate=cost,
            )(w, seed_arr, img2)
            out = jax.block_until_ready(out)
        except Exception:
            out = None   # stateful PRNG path unavailable here: fall back below

    if out is None:
        if noise is None:
            assert key is not None, "need a PRNG key (or seed) to sample noise"
            noise = jax.random.normal(key, (B, 1, H, W), dtype=dtype)
        noise2 = noise.reshape(B, 1, HW)
        if HW_pad != HW:
            noise2 = jnp.pad(noise2, ((0, 0), (0, 0), (0, HW_pad - HW)))
        out = pl.pallas_call(
            _noise_add_kernel,
            out_shape=out_shape,
            grid=grid,
            in_specs=[
                smem_spec,                                          # weight (1,) f32
                img_spec,                                           # image tile
                pl.BlockSpec((1, 1, T), lambda b, t, c: (b, 0, t)),  # noise tile (bcast over C)
            ],
            out_specs=out_spec,
            input_output_aliases={1: 0},            # alias image buffer -> output
            compiler_params=compiler_params,
            cost_estimate=cost,
        )(w, img2, noise2)

    if HW_pad != HW:
        out = out[..., :HW]
    return out.reshape(B, C, H, W)


if __name__ == "__main__":
    root = jax.random.PRNGKey(0)
    k_img, k_noise, k_img2 = jax.random.split(root, 3)

    # Shapes implied by the module: NCHW feature map, (B,1,H,W) noise, scalar weight.
    B, C, H, W = 2, 4, 16, 16
    image = jax.random.normal(k_img, (B, C, H, W), dtype=jnp.float32)
    weight0 = jnp.zeros((1,), dtype=jnp.float32)     # nn.Parameter(torch.zeros(1))

    # Case 1: noise=None path (in-kernel RNG when available); weight=0 -> exact identity.
    out0 = jax.block_until_ready(noise_injection(image, weight0, noise=None, key=k_noise))
    assert out0.shape == (B, C, H, W)
    assert jnp.allclose(out0, image, atol=1e-6), "weight=0 path must return image"

    # Case 2: explicit noise + nonzero weight vs pure-JAX reference.
    noise = jax.random.normal(k_noise, (B, 1, H, W), dtype=jnp.float32)
    weight = jnp.array([0.5], dtype=jnp.float32)
    out1 = jax.block_until_ready(noise_injection(image, weight, noise=noise))
    ref1 = image + weight[0] * noise
    assert jnp.allclose(out1, ref1, atol=1e-6, rtol=1e-6), "mismatch vs reference"

    # Case 3: HW not a multiple of 128 (exercises the lane-padding path) + odd C.
    imgp = jax.random.normal(k_img2, (1, 3, 6, 6), dtype=jnp.float32)
    noisep = jax.random.normal(k_noise, (1, 1, 6, 6), dtype=jnp.float32)
    wp = jnp.array([0.3], dtype=jnp.float32)
    outp = jax.block_until_ready(noise_injection(imgp, wp, noise=noisep))
    refp = imgp + wp[0] * noisep
    assert jnp.allclose(outp, refp, atol=1e-6, rtol=1e-6), "padded-HW path mismatch"

    # Case 4: sampled noise must broadcast identically across channels and be ~N(0,1).
    img4 = jax.random.normal(k_img, (1, 2, 64, 64), dtype=jnp.float32)
    w1 = jnp.array([1.0], dtype=jnp.float32)
    out4 = jax.block_until_ready(noise_injection(img4, w1, noise=None, key=k_noise))
    delta = out4 - img4
    assert jnp.allclose(delta[:, 0], delta[:, 1], atol=1e-5), "noise must be shared across C"
    m, s = jnp.mean(delta[:, 0]), jnp.std(delta[:, 0])
    assert jnp.abs(m) < 0.2 and 0.8 < s < 1.2, "sampled noise should be ~N(0,1)"

    print("KERNEL_OK")
</pallas_src>

<mosaic_0001>
module attributes {stable_mosaic.version = 11 : i64} {
  func.func @_noise_gen_kernel(%arg0: i32, %arg1: i32, %arg2: i32, %arg3: memref<1xf32, #tpu.memory_space<smem>>, %arg4: memref<1xi32, #tpu.memory_space<smem>>, %arg5: memref<1x4x256xf32, #tpu.memory_space<vmem>>, %arg6: memref<1x4x256xf32, #tpu.memory_space<vmem>>) attributes {dimension_semantics = [#tpu.dimension_semantics<parallel>, #tpu.dimension_semantics<parallel>, #tpu.dimension_semantics<parallel>], iteration_bounds = array<i64: 2, 1, 1>, scalar_prefetch = 0 : i64, scratch_operands = 0 : i64, tpu.core_type = #tpu.core_type<tc>, window_params = [{transform_indices = @transform_0, window_bounds = array<i64: 1>}, {transform_indices = @transform_1, window_bounds = array<i64: 1>}, {transform_indices = @transform_2, window_bounds = array<i64: 1, 4, 256>}, {transform_indices = @transform_3, window_bounds = array<i64: 1, 4, 256>}]} {
    %c0 = arith.constant 0 : index
    %0 = memref.load %arg4[%c0] : memref<1xi32, #tpu.memory_space<smem>>
    %c1_i32 = arith.constant 1 : i32
    %1 = arith.muli %arg0, %c1_i32 : i32
    %2 = arith.addi %0, %1 : i32
    %3 = arith.addi %2, %arg1 : i32
    "tpu.prng_set_seed_32"(%3) : (i32) -> ()
    %c0_i32 = arith.constant 0 : i32
    %c0_i32_0 = arith.constant 0 : i32
    %cst = arith.constant -0.99999994 : f32
    %cst_1 = arith.constant 1.000000e+00 : f32
    %4 = vector.broadcast %cst : f32 to vector<1x1xf32>
    %5 = vector.broadcast %cst_1 : f32 to vector<1x1xf32>
    %6 = "tpu.prng_random_bits"() : () -> vector<1x256xi32>
    %c9_i32 = arith.constant 9 : i32
    %7 = vector.broadcast %c9_i32 : i32 to vector<1x256xi32>
    %8 = arith.shrui %6, %7 : vector<1x256xi32>
    %c1065353216_i32 = arith.constant 1065353216 : i32
    %9 = vector.broadcast %c1065353216_i32 : i32 to vector<1x256xi32>
    %10 = arith.ori %8, %9 : vector<1x256xi32>
    %11 = tpu.bitcast %10 : vector<1x256xi32> -> vector<1x256xf32>
    %cst_2 = arith.constant 1.000000e+00 : f32
    %12 = vector.broadcast %cst_2 : f32 to vector<1x256xf32>
    %13 = arith.subf %11, %12 : vector<1x256xf32>
    %14 = arith.subf %5, %4 : vector<1x1xf32>
    %15 = vector.broadcast %14 : vector<1x1xf32> to vector<1x256xf32>
    %16 = arith.mulf %13, %15 : vector<1x256xf32>
    %17 = vector.broadcast %4 : vector<1x1xf32> to vector<1x256xf32>
    %18 = arith.addf %16, %17 : vector<1x256xf32>
    %19 = vector.broadcast %4 : vector<1x1xf32> to vector<1x256xf32>
    %20 = arith.maximumf %19, %18 : vector<1x256xf32>
    %cst_3 = arith.constant 0.000000e+00 : f32
    %21 = vector.broadcast %cst_3 : f32 to vector<1x256xf32>
    %22 = arith.subf %21, %20 : vector<1x256xf32>
    %23 = arith.mulf %20, %22 : vector<1x256xf32>
    %24 = math.log1p %23 : vector<1x256xf32>
    %cst_4 = arith.constant 0.000000e+00 : f32
    %25 = vector.broadcast %cst_4 : f32 to vector<1x256xf32>
    %26 = arith.subf %25, %24 : vector<1x256xf32>
    %cst_5 = arith.constant 5.000000e+00 : f32
    %27 = vector.broadcast %cst_5 : f32 to vector<1x256xf32>
    %28 = arith.cmpf olt, %26, %27 : vector<1x256xf32>
    %cst_6 = arith.constant 2.500000e+00 : f32
    %29 = vector.broadcast %cst_6 : f32 to vector<1x256xf32>
    %30 = arith.subf %26, %29 : vector<1x256xf32>
    %31 = math.sqrt %26 : vector<1x256xf32>
    %cst_7 = arith.constant 3.000000e+00 : f32
    %32 = vector.broadcast %cst_7 : f32 to vector<1x256xf32>
    %33 = arith.subf %31, %32 : vector<1x256xf32>
    %34 = arith.select %28, %30, %33 : vector<1x256xi1>, vector<1x256xf32>
    %cst_8 = arith.constant 2.81022636E-8 : f32
    %cst_9 = arith.constant -2.00214257E-4 : f32
    %35 = vector.broadcast %cst_8 : f32 to vector<1x256xf32>
    %36 = vector.broadcast %cst_9 : f32 to vector<1x256xf32>
    %37 = arith.select %28, %35, %36 : vector<1x256xi1>, vector<1x256xf32>
    %cst_10 = arith.constant 3.43273939E-7 : f32
    %cst_11 = arith.constant 1.00950558E-4 : f32
    %38 = vector.broadcast %cst_10 : f32 to vector<1x256xf32>
    %39 = vector.broadcast %cst_11 : f32 to vector<1x256xf32>
    %40 = arith.select %28, %38, %39 : vector<1x256xi1>, vector<1x256xf32>
    %41 = arith.mulf %37, %34 : vector<1x256xf32>
    %42 = arith.addf %40, %41 : vector<1x256xf32>
    %cst_12 = arith.constant -3.5233877E-6 : f32
    %cst_13 = arith.constant 0.00134934322 : f32
    %43 = vector.broadcast %cst_12 : f32 to vector<1x256xf32>
    %44 = vector.broadcast %cst_13 : f32 to vector<1x256xf32>
    %45 = arith.select %28, %43, %44 : vector<1x256xi1>, vector<1x256xf32>
    %46 = arith.mulf %42, %34 : vector<1x256xf32>
    %47 = arith.addf %45, %46 : vector<1x256xf32>
    %cst_14 = arith.constant -4.39150654E-6 : f32
    %cst_15 = arith.constant -0.00367342844 : f32
    %48 = vector.broadcast %cst_14 : f32 to vector<1x256xf32>
    %49 = vector.broadcast %cst_15 : f32 to vector<1x256xf32>
    %50 = arith.select %28, %48, %49 : vector<1x256xi1>, vector<1x256xf32>
    %51 = arith.mulf %47, %34 : vector<1x256xf32>
    %52 = arith.addf %50, %51 : vector<1x256xf32>
    %cst_16 = arith.constant 2.1858087E-4 : f32
    %cst_17 = arith.constant 0.00573950773 : f32
    %53 = vector.broadcast %cst_16 : f32 to vector<1x256xf32>
    %54 = vector.broadcast %cst_17 : f32 to vector<1x256xf32>
    %55 = arith.select %28, %53, %54 : vector<1x256xi1>, vector<1x256xf32>
    %56 = arith.mulf %52, %34 : vector<1x256xf32>
    %57 = arith.addf %55, %56 : vector<1x256xf32>
    %cst_18 = arith.constant -0.00125372503 : f32
    %cst_19 = arith.constant -0.0076224613 : f32
    %58 = vector.broadcast %cst_18 : f32 to vector<1x256xf32>
    %59 = vector.broadcast %cst_19 : f32 to vector<1x256xf32>
    %60 = arith.select %28, %58, %59 : vector<1x256xi1>, vector<1x256xf32>
    %61 = arith.mulf %57, %34 : vector<1x256xf32>
    %62 = arith.addf %60, %61 : vector<1x256xf32>
    %cst_20 = arith.constant -0.00417768164 : f32
    %cst_21 = arith.constant 0.00943887047 : f32
    %63 = vector.broadcast %cst_20 : f32 to vector<1x256xf32>
    %64 = vector.broadcast %cst_21 : f32 to vector<1x256xf32>
    %65 = arith.select %28, %63, %64 : vector<1x256xi1>, vector<1x256xf32>
    %66 = arith.mulf %62, %34 : vector<1x256xf32>
    %67 = arith.addf %65, %66 : vector<1x256xf32>
    %cst_22 = arith.constant 0.246640727 : f32
    %cst_23 = arith.constant 1.00167406 : f32
    %68 = vector.broadcast %cst_22 : f32 to vector<1x256xf32>
    %69 = vector.broadcast %cst_23 : f32 to vector<1x256xf32>
    %70 = arith.select %28, %68, %69 : vector<1x256xi1>, vector<1x256xf32>
    %71 = arith.mulf %67, %34 : vector<1x256xf32>
    %72 = arith.addf %70, %71 : vector<1x256xf32>
    %cst_24 = arith.constant 1.50140941 : f32
    %cst_25 = arith.constant 2.83297682 : f32
    %73 = vector.broadcast %cst_24 : f32 to vector<1x256xf32>
    %74 = vector.broadcast %cst_25 : f32 to vector<1x256xf32>
    %75 = arith.select %28, %73, %74 : vector<1x256xi1>, vector<1x256xf32>
    %76 = arith.mulf %72, %34 : vector<1x256xf32>
    %77 = arith.addf %75, %76 : vector<1x256xf32>
    %78 = math.absf %20 : vector<1x256xf32>
    %cst_26 = arith.constant 1.000000e+00 : f32
    %79 = vector.broadcast %cst_26 : f32 to vector<1x256xf32>
    %80 = arith.cmpf oeq, %78, %79 : vector<1x256xf32>
    %cst_27 = arith.constant 0x7F800000 : f32
    %81 = vector.broadcast %cst_27 : f32 to vector<1x256xf32>
    %82 = arith.mulf %81, %20 : vector<1x256xf32>
    %83 = arith.mulf %77, %20 : vector<1x256xf32>
    %84 = arith.select %80, %82, %83 : vector<1x256xi1>, vector<1x256xf32>
    %cst_28 = arith.constant 1.41421354 : f32
    %85 = vector.broadcast %cst_28 : f32 to vector<1x256xf32>
    %86 = arith.mulf %85, %84 : vector<1x256xf32>
    %c0_29 = arith.constant 0 : index
    %c0_30 = arith.constant 0 : index
    %c0_31 = arith.constant 0 : index
    %87 = vector.load %arg5[%c0_29, %c0_30, %c0_31] : memref<1x4x256xf32, #tpu.memory_space<vmem>>, vector<1x4x256xf32>
    %c0_32 = arith.constant 0 : index
    %88 = memref.load %arg3[%c0_32] : memref<1xf32, #tpu.memory_space<smem>>
    %89 = vector.broadcast %88 : f32 to vector<1x256xf32>
    %90 = arith.mulf %89, %86 : vector<1x256xf32>
    %91 = vector.shape_cast %90 : vector<1x256xf32> to vector<1x1x256xf32>
    %92 = vector.broadcast %91 : vector<1x1x256xf32> to vector<1x4x256xf32>
    %93 = arith.addf %87, %92 : vector<1x4x256xf32>
    %c0_33 = arith.constant 0 : index
    %c0_34 = arith.constant 0 : index
    %c0_35 = arith.constant 0 : index
    %94 = vector.load %arg6[%c0_33, %c0_34, %c0_35] : memref<1x4x256xf32, #tpu.memory_space<vmem>>, vector<1x4x256xf32>
    tpu.vector_store %arg6[%c0_33, %c0_34, %c0_35], %93 {strides = array<i32>} : memref<1x4x256xf32, #tpu.memory_space<vmem>>, vector<1x4x256xf32>,
    return
  }
  func.func @transform_0(%arg0: i32, %arg1: i32, %arg2: i32) -> i32 {
    %c0_i32 = arith.constant 0 : i32
    %c0_i32_0 = arith.constant 0 : i32
    return %c0_i32 : i32
  }
  func.func @transform_1(%arg0: i32, %arg1: i32, %arg2: i32) -> i32 {
    %c0_i32 = arith.constant 0 : i32
    %c0_i32_0 = arith.constant 0 : i32
    return %c0_i32 : i32
  }
  func.func @transform_2(%arg0: i32, %arg1: i32, %arg2: i32) -> (i32, i32, i32) {
    %c0_i32 = arith.constant 0 : i32
    return %arg0, %arg2, %arg1 : i32, i32, i32
  }
  func.func @transform_3(%arg0: i32, %arg1: i32, %arg2: i32) -> (i32, i32, i32) {
    %c0_i32 = arith.constant 0 : i32
    return %arg0, %arg2, %arg1 : i32, i32, i32
  }
}

module attributes {stable_mosaic.version = 11 : i64} {
  func.func @_noise_add_kernel(%arg0: i32, %arg1: i32, %arg2: i32, %arg3: memref<1xf32, #tpu.memory_space<smem>>, %arg4: memref<1x4x256xf32, #tpu.memory_space<vmem>>, %arg5: memref<1x1x256xf32, #tpu.memory_space<vmem>>, %arg6: memref<1x4x256xf32, #tpu.memory_space<vmem>>) attributes {dimension_semantics = [#tpu.dimension_semantics<parallel>, #tpu.dimension_semantics<parallel>, #tpu.dimension_semantics<parallel>], iteration_bounds = array<i64: 2, 1, 1>, scalar_prefetch = 0 : i64, scratch_operands = 0 : i64, tpu.core_type = #tpu.core_type<tc>, window_params = [{transform_indices = @transform_0, window_bounds = array<i64: 1>}, {transform_indices = @transform_1, window_bounds = array<i64: 1, 4, 256>}, {transform_indices = @transform_2, window_bounds = array<i64: 1, 1, 256>}, {transform_indices = @transform_3, window_bounds = array<i64: 1, 4, 256>}]} {
    %c0 = arith.constant 0 : index
    %c0_0 = arith.constant 0 : index
    %c0_1 = arith.constant 0 : index
    %0 = vector.load %arg4[%c0, %c0_0, %c0_1] : memref<1x4x256xf32, #tpu.memory_space<vmem>>, vector<1x4x256xf32>
    %c0_2 = arith.constant 0 : index
    %c0_3 = arith.constant 0 : index
    %c0_4 = arith.constant 0 : index
    %1 = vector.load %arg5[%c0_2, %c0_3, %c0_4] : memref<1x1x256xf32, #tpu.memory_space<vmem>>, vector<1x1x256xf32>
    %c0_5 = arith.constant 0 : index
    %2 = memref.load %arg3[%c0_5] : memref<1xf32, #tpu.memory_space<smem>>
    %3 = vector.broadcast %2 : f32 to vector<1x1x256xf32>
    %4 = arith.mulf %3, %1 : vector<1x1x256xf32>
    %5 = vector.broadcast %4 : vector<1x1x256xf32> to vector<1x4x256xf32>
    %6 = arith.addf %0, %5 : vector<1x4x256xf32>
    %c0_6 = arith.constant 0 : index
    %c0_7 = arith.constant 0 : index
    %c0_8 = arith.constant 0 : index
    %7 = vector.load %arg6[%c0_6, %c0_7, %c0_8] : memref<1x4x256xf32, #tpu.memory_space<vmem>>, vector<1x4x256xf32>
    tpu.vector_store %arg6[%c0_6, %c0_7, %c0_8], %6 {strides = array<i32>} : memref<1x4x256xf32, #tpu.memory_space<vmem>>, vector<1x4x256xf32>,
    return
  }
  func.func @transform_0(%arg0: i32, %arg1: i32, %arg2: i32) -> i32 {
    %c0_i32 = arith.constant 0 : i32
    %c0_i32_0 = arith.constant 0 : i32
    return %c0_i32 : i32
  }
  func.func @transform_1(%arg0: i32, %arg1: i32, %arg2: i32) -> (i32, i32, i32) {
    %c0_i32 = arith.constant 0 : i32
    return %arg0, %arg2, %arg1 : i32, i32, i32
  }
  func.func @transform_2(%arg0: i32, %arg1: i32, %arg2: i32) -> (i32, i32, i32) {
    %c0_i32 = arith.constant 0 : i32
    %c0_i32_0 = arith.constant 0 : i32
    return %arg0, %c0_i32, %arg1 : i32, i32, i32
  }
  func.func @transform_3(%arg0: i32, %arg1: i32, %arg2: i32) -> (i32, i32, i32) {
    %c0_i32 = arith.constant 0 : i32
    return %arg0, %arg2, %arg1 : i32, i32, i32
  }
}

</mosaic_0001>

<llo_original>
// kernel: tpu_custom_call.1
$region0: #{tpu_custom_call.1}
  #allocation0 [shape = 'u32[]', space=smem, size = 0x4, offset = 0x4, fixed_abs, tag = 'smem constant byte address 0x4 - core index']
  #allocation1 [shape = 'u32[72,128]{1,0:T(1,128)}', space=vmem, size = 0x9000, scoped, tag = 'internal scratch']
  #allocation2 [shape = 'f32[1]{0:T(128)S(6)}', space=smem, size = 0x200, scoped, tag = 'scoped memory for tpu_custom_call.1']
  #allocation3 [shape = 's32[1]{0:T(128)S(6)}', space=smem, size = 0x200, scoped, tag = 'scoped memory for tpu_custom_call.1']
  %s0 = inlined_call_operand.<no memory space> [shape: f32[1], index: 0, kind: input, shape index: {}]
  %s1 = inlined_call_operand.<no memory space> [shape: s32[1], index: 1, kind: input, shape index: {}]
  %s2 = inlined_call_operand.hbm [shape: f32[2,4,256], index: 2, kind: input, shape index: {}, may-alias: {2,3}]
  %s3 = inlined_call_operand.hbm [shape: f32[2,4,256], index: 3, kind: output, shape index: {}, may-alias: {2,3}]
  %s4 = sld [smem:[#allocation0]]
  $region49: #{tpu_custom_call.1} parent=0
    _
  %s6 = ssub.s32 1, %s4
  %s7 = scalar_select 0, %s6, %s4
  %8 = sst [smem:[#allocation2]] %s0
  %9 = sst [smem:[#allocation3]] %s1
  $region1: #{tpu_custom_call.1} parent=0
    #allocation4 [shape = 'u8[8192]{0}', space=vmem, size = 0x2000, scoped, tag = 'input window, operand 2']
    #allocation5 [shape = 's32[2]{0}', space=sflag, size = 0x8, scoped, tag = 'scoped memory for tpu_custom_call.1']
    #allocation6 [shape = 's32[2]{0}', space=sflag, size = 0x8, scoped, tag = 'scoped memory for tpu_custom_call.1']
    #allocation7 [shape = 'u8[8192]{0}', space=vmem, size = 0x2000, scoped, tag = 'output window, operand 0']
    %10 = vsyncpa [#allocation5], 0
    %s11 = scalar_lea.sflag [#allocation5], 1
    %12 = vsyncpa %s11, 0
    %13 = vsyncpa [#allocation6], 0
    %s14 = scalar_lea.sflag [#allocation6], 1
    %15 = vsyncpa %s14, 0
    loop: start=0, step=1, limit=4
    $region2: #{tpu_custom_call.1} parent=1 // loop_pre_header
      _
    $region3: #{tpu_custom_call.1} parent=1 // loop_header
      %s17 = sphi 0, %s21
      %p18 = scmp.ge.s32.totalorder %s17, 4
      %s24 = sphi 0, %s43
      %s25 = sphi 0, %s39
      %s26 = sphi 0, %s35
      %s27 = sphi 0, %s24
      %s28 = sphi 0, %s25
      %s29 = sphi 0, %s26
      %s30 = sphi 0, %s27
      %s31 = sphi 0, %s28
      %s32 = sphi 0, %s29
      %s44 = sphi 0, %s44
      %s46 = sphi 0, %s44
      %s47 = sphi 0, %s46
      %s61 = sphi 0, %s47
      %s65 = sphi 0, %s65
      %s67 = sphi 0, %s65
      %s68 = sphi 0, %s67
      %s82 = sphi 0, %s68
      %s92 = sphi 0, %s94
      %s95 = sphi 0, %s92
      %s96 = sphi 0, %s95
      %s112 = sphi 0, %s96
      %s122 = sphi 0, %s124
      %s125 = sphi 0, %s122
      %s126 = sphi 0, %s125
      %s142 = sphi 0, %s126
    $region4: #{tpu_custom_call.1} parent=1 // loop_header_branch
      %20 = sbr.rel (%p18) target = $region8
    $region5: #{tpu_custom_call.1} parent=1 // loop_body
      %s22 = ssub.s32 %s17, 1
      %s23 = ssub.s32 %s17, 2
      %s33 = sadd.s32 1, %s26
      %p34 = scmp.ge.s32.totalorder %s33, 1
      %s35 = scalar_select %p34, 0, %s33
      %s36 = sadd.s32 1, %s25
      %s37 = scalar_select %p34, %s36, %s25
      %p38 = scmp.ge.s32.totalorder %s37, 1
      %s39 = scalar_select %p38, 0, %s37
      %s40 = sadd.s32 1, %s24
      %s41 = scalar_select %p38, %s40, %s24
      %p42 = scmp.ge.s32.totalorder %s41, 2
      %s43 = scalar_select %p42, 0, %s41
      %s45 = sadd.s32 %s44, 1
      %p48 = scmp.eq.s32.totalorder %s17, 1
      %p49 = scmp.ne.s32.totalorder %s44, %s46
      %p50 = scmp.eq.s32.totalorder %s17, 0
      %p51 = por %p49, %p50
      %p52 = scmp.ne.s32.totalorder %s44, %s46
      %p53 = scmp.eq.s32.totalorder %s22, 1
      %p54 = por %p52, %p53
      %p55 = scmp.ne.s32.totalorder %s46, %s47
      %p56 = scmp.eq.s32.totalorder %s22, 0
      %p57 = por %p55, %p56
      %p58 = scmp.ne.s32.totalorder %s46, %s47
      %p59 = scmp.eq.s32.totalorder %s23, 1
      %p60 = por %p58, %p59
      %p62 = scmp.ne.s32.totalorder %s47, %s61
      %p63 = scmp.eq.s32.totalorder %s23, 0
      %p64 = por %p62, %p63
      %s66 = sadd.s32 %s65, 1
      %p69 = scmp.eq.s32.totalorder %s17, 1
      %p70 = scmp.ne.s32.totalorder %s65, %s67
      %p71 = scmp.eq.s32.totalorder %s17, 0
      %p72 = por %p70, %p71
      %p73 = scmp.ne.s32.totalorder %s65, %s67
      %p74 = scmp.eq.s32.totalorder %s22, 1
      %p75 = por %p73, %p74
      %p76 = scmp.ne.s32.totalorder %s67, %s68
      %p77 = scmp.eq.s32.totalorder %s22, 0
      %p78 = por %p76, %p77
      %p79 = scmp.ne.s32.totalorder %s67, %s68
      %p80 = scmp.eq.s32.totalorder %s23, 1
      %p81 = por %p79, %p80
      %p83 = scmp.ne.s32.totalorder %s68, %s82
      %p84 = scmp.eq.s32.totalorder %s23, 0
      %p85 = por %p83, %p84
      %s86 = ssub.s32 %s24, %s43
      %s87 = ssub.s32 %s26, %s35
      %s88 = sor.u32 %s86, %s87
      %s89 = ssub.s32 %s25, %s39
      %s90 = sor.u32 %s88, %s89
      %p91 = scmp.eq.s32.totalorder %s90, 0
      %s93 = sadd.s32 %s92, 1
      %s94 = scalar_select %p91, %s92, %s93
      %p97 = pneg %p91
      %p98 = scmp.eq.s32.totalorder %s17, 1
      %p99 = por %p97, %p98
      %p100 = scmp.ne.s32.totalorder %s92, %s95
      %p101 = scmp.eq.s32.totalorder %s17, 0
      %p102 = por %p100, %p101
      %p103 = scmp.ne.s32.totalorder %s92, %s95
      %p104 = scmp.eq.s32.totalorder %s22, 1
      %p105 = por %p103, %p104
      %p106 = scmp.ne.s32.totalorder %s95, %s96
      %p107 = scmp.eq.s32.totalorder %s22, 0
      %p108 = por %p106, %p107
      %p109 = scmp.ne.s32.totalorder %s95, %s96
      %p110 = scmp.eq.s32.totalorder %s23, 1
      %p111 = por %p109, %p110
      %p113 = scmp.ne.s32.totalorder %s96, %s112
      %p114 = scmp.eq.s32.totalorder %s23, 0
      %p115 = por %p113, %p114
      %s116 = ssub.s32 %s24, %s43
      %s117 = ssub.s32 %s26, %s35
      %s118 = sor.u32 %s116, %s117
      %s119 = ssub.s32 %s25, %s39
      %s120 = sor.u32 %s118, %s119
      %p121 = scmp.eq.s32.totalorder %s120, 0
      %s123 = sadd.s32 %s122, 1
      %s124 = scalar_select %p121, %s122, %s123
      %p127 = pneg %p121
      %p128 = scmp.eq.s32.totalorder %s17, 1
      %p129 = por %p127, %p128
      %p130 = scmp.ne.s32.totalorder %s122, %s125
      %p131 = scmp.eq.s32.totalorder %s17, 0
      %p132 = por %p130, %p131
      %p133 = scmp.ne.s32.totalorder %s122, %s125
      %p134 = scmp.eq.s32.totalorder %s22, 1
      %p135 = por %p133, %p134
      %p136 = scmp.ne.s32.totalorder %s125, %s126
      %p137 = scmp.eq.s32.totalorder %s22, 0
      %p138 = por %p136, %p137
      %p139 = scmp.ne.s32.totalorder %s125, %s126
      %p140 = scmp.eq.s32.totalorder %s23, 1
      %p141 = por %p139, %p140
      %p143 = scmp.ne.s32.totalorder %s126, %s142
      %p144 = scmp.eq.s32.totalorder %s23, 0
      %p145 = por %p143, %p144
      %p146 = scmp.le.s32.totalorder 1, %s17
      %p147 = scmp.lt.s32.totalorder %s17, 3
      %p148 = pnand %p146, %p147
      %p149 = pneg %p148
      // Predicated region
      $region9: #{tpu_custom_call.1} parent=5 // pred_check
        _
      $region10: #{tpu_custom_call.1} parent=5 // pred_check_branch
        %151 = sbr.rel (%p148) target = $region12
      $region11: #{tpu_custom_call.1} parent=5 // pred_region
        %s152 = ssub.s32 %s17, 1
        // Predicated region
        $region13: #{tpu_custom_call.1} parent=11 // pred_check
          %p153 = pneg %p57
        $region14: #{tpu_custom_call.1} parent=11 // pred_check_branch
          %155 = sbr.rel (%p153) target = $region16
        $region15: #{tpu_custom_call.1} parent=11 // pred_region
          _
        $region16: #{tpu_custom_call.1} parent=11 // pred_fallthru
          _
        // Predicated region
        $region17: #{tpu_custom_call.1} parent=11 // pred_check
          %p156 = pneg %p78
        $region18: #{tpu_custom_call.1} parent=11 // pred_check_branch
          %158 = sbr.rel (%p156) target = $region20
        $region19: #{tpu_custom_call.1} parent=11 // pred_region
          _
        $region20: #{tpu_custom_call.1} parent=11 // pred_fallthru
          _
      $region12: #{tpu_custom_call.1} parent=5 // pred_fallthru
        _
      %p159 = scmp.lt.s32.totalorder %s17, 2
      // Predicated region
      $region21: #{tpu_custom_call.1} parent=5 // pred_check
        %p160 = pneg %p159
      $region22: #{tpu_custom_call.1} parent=5 // pred_check_branch
        %162 = sbr.rel (%p160) target = $region24
      $region23: #{tpu_custom_call.1} parent=5 // pred_region
        // Predicated region
        $region25: #{tpu_custom_call.1} parent=23 // pred_check
          %p163 = pneg %p102
        $region26: #{tpu_custom_call.1} parent=23 // pred_check_branch
          %165 = sbr.rel (%p163) target = $region28
        $region27: #{tpu_custom_call.1} parent=23 // pred_region
          %s166 = sand.u32 %s92, 1
          %s167 = scalar_lea.sflag [#allocation5], %s166
          %s168 = sand.u32 %s92, 1
          %s169 = smul.addr %s168, 8
          %s170 = scalar_lea.vmem [#allocation4], %s169
          %s171 = smul.u32 2, %s25
          %173 = vsyncadd %s167, 0
          %s174 = smul.addr %s26, 2
          %s175 = sadd.s32 %s171, %s174
          %s176 = smul.addr %s24, 2
          %s177 = sadd.s32 %s175, %s176
          %s178 = smul.addr %s177, 4
          %s179 = scalar_lea.hbm %s2, %s178
          %s181 = sshll.u32 %s179, 4
          %s182 = int_to_ptr.hbm [resolvable:$true] %s181
          %s183 = sshll.u32 %s170, 4
          %s184 = int_to_ptr.vmem [resolvable:$true] %s183
          %186 = dma.hbm_to_vmem [thread:$0]  %s182, 128, %s184, %s167
        $region28: #{tpu_custom_call.1} parent=23 // pred_fallthru
          _
      $region24: #{tpu_custom_call.1} parent=5 // pred_fallthru
        _
      %p187 = scmp.le.s32.totalorder 1, %s17
      %p188 = scmp.lt.s32.totalorder %s17, 3
      %p189 = pnand %p187, %p188
      %p190 = pneg %p189
      // Predicated region
      $region29: #{tpu_custom_call.1} parent=5 // pred_check
        _
      $region30: #{tpu_custom_call.1} parent=5 // pred_check_branch
        %192 = sbr.rel (%p189) target = $region32
      $region31: #{tpu_custom_call.1} parent=5 // pred_region
        %s193 = ssub.s32 %s17, 1
        %s194 = sand.u32 %s95, 1
        %s195 = scalar_lea.sflag [#allocation5], %s194
        %s196 = sand.u32 %s95, 1
        %s197 = smul.addr %s196, 8
        %s198 = scalar_lea.vmem [#allocation4], %s197
        // Predicated region
        $region33: #{tpu_custom_call.1} parent=31 // pred_check
          %p199 = pneg %p108
        $region34: #{tpu_custom_call.1} parent=31 // pred_check_branch
          %201 = sbr.rel (%p199) target = $region36
        $region35: #{tpu_custom_call.1} parent=31 // pred_region
          %203 = dma.done %s195, 128
        $region36: #{tpu_custom_call.1} parent=31 // pred_fallthru
          _
        %p204 = pneg %p57
        %p205 = pneg %p54
        %p206 = pneg %p78
        %p207 = pneg %p75
        %s208 = sand.u32 %s95, 1
        %s209 = scalar_lea.sflag [#allocation5], %s208
        %s210 = sand.u32 %s95, 1
        %s211 = smul.addr %s210, 8
        %s212 = scalar_lea.vmem [#allocation4], %s211
        %p213 = pneg %p108
        %p214 = pneg %p105
        %p215 = pneg %p138
        %p216 = pneg %p135
        %s217 = sand.u32 %s125, 1
        %s218 = scalar_lea.sflag [#allocation6], %s217
        %s219 = sand.u32 %s125, 1
        %s220 = smul.addr %s219, 8
        %s221 = scalar_lea.vmem [#allocation7], %s220
        %s222 = smul.u32 2, %s28
        %s223 = smul.u32 2, %s28
        %s224 = sld [smem:[#allocation3]]
        %s225 = sadd.s32 %s224, %s27
        %s226 = sadd.s32 %s225, %s28
        %v227 = vlaneseq
        %v228 = vstv %s226
        %v229 = vxor.u32 %v228, %v228
        %v230 = vxor.u32 %v229, 466688986
        %v231 = vadd.s32 %v227, %v228
        %v232 = vadd.s32 %v231, %v231
        %v233 = vshll.u32 %v231, 13
        %v234 = vshrl.u32 %v231, 19
        %v235 = vor.u32 %v233, %v234
        %v236 = vxor.u32 %v232, %v235
        %v237 = vadd.s32 %v232, %v236
        %v238 = vshll.u32 %v236, 15
        %v239 = vshrl.u32 %v236, 17
        %v240 = vor.u32 %v238, %v239
        %v241 = vxor.u32 %v237, %v240
        %v242 = vadd.s32 %v237, %v241
        %v243 = vshll.u32 %v241, 26
        %v244 = vshrl.u32 %v241, 6
        %v245 = vor.u32 %v243, %v244
        %v246 = vxor.u32 %v242, %v245
        %v247 = vadd.s32 %v242, %v246
        %v248 = vshll.u32 %v246, 6
        %v249 = vshrl.u32 %v246, 26
        %v250 = vor.u32 %v248, %v249
        %v251 = vxor.u32 %v247, %v250
        %v252 = vadd.s32 %v247, %v228
        %v253 = vadd.s32 %v251, %v230
        %v254 = vadd.s32 %v253, 1
        %v255 = vadd.s32 %v252, %v254
        %v256 = vshll.u32 %v254, 17
        %v257 = vshrl.u32 %v254, 15
        %v258 = vor.u32 %v256, %v257
        %v259 = vxor.u32 %v255, %v258
        %v260 = vadd.s32 %v255, %v259
        %v261 = vshll.u32 %v259, 29
        %v262 = vshrl.u32 %v259, 3
        %v263 = vor.u32 %v261, %v262
        %v264 = vxor.u32 %v260, %v263
        %v265 = vadd.s32 %v260, %v264
        %v266 = vshll.u32 %v264, 16
        %v267 = vshrl.u32 %v264, 16
        %v268 = vor.u32 %v266, %v267
        %v269 = vxor.u32 %v265, %v268
        %v270 = vadd.s32 %v265, %v269
        %v271 = vshll.u32 %v269, 24
        %v272 = vshrl.u32 %v269, 8
        %v273 = vor.u32 %v271, %v272
        %v274 = vxor.u32 %v270, %v273
        %v275 = vadd.s32 %v270, %v230
        %v276 = vadd.s32 %v274, %v228
        %v277 = vadd.s32 %v276, 2
        %v278 = vadd.s32 %v275, %v277
        %v279 = vshll.u32 %v277, 13
        %v280 = vshrl.u32 %v277, 19
        %v281 = vor.u32 %v279, %v280
        %v282 = vxor.u32 %v278, %v281
        %v283 = vadd.s32 %v278, %v282
        %v284 = vshll.u32 %v282, 15
        %v285 = vshrl.u32 %v282, 17
        %v286 = vor.u32 %v284, %v285
        %v287 = vxor.u32 %v283, %v286
        %v288 = vadd.s32 %v283, %v287
        %v289 = vshll.u32 %v287, 26
        %v290 = vshrl.u32 %v287, 6
        %v291 = vor.u32 %v289, %v290
        %v292 = vxor.u32 %v288, %v291
        %v293 = vadd.s32 %v288, %v292
        %v294 = vshll.u32 %v292, 6
        %v295 = vshrl.u32 %v292, 26
        %v296 = vor.u32 %v294, %v295
        %v297 = vxor.u32 %v293, %v296
        %v298 = vadd.s32 %v293, %v228
        %v299 = vadd.s32 %v297, %v228
        %v300 = vadd.s32 %v299, 3
        %v301 = vadd.s32 %v298, %v300
        %v302 = vshll.u32 %v300, 17
        %v303 = vshrl.u32 %v300, 15
        %v304 = vor.u32 %v302, %v303
        %v305 = vxor.u32 %v301, %v304
        %v306 = vadd.s32 %v301, %v305
        %v307 = vshll.u32 %v305, 29
        %v308 = vshrl.u32 %v305, 3
        %v309 = vor.u32 %v307, %v308
        %v310 = vxor.u32 %v306, %v309
        %v311 = vadd.s32 %v306, %v310
        %v312 = vshll.u32 %v310, 16
        %v313 = vshrl.u32 %v310, 16
        %v314 = vor.u32 %v312, %v313
        %v315 = vxor.u32 %v311, %v314
        %v316 = vadd.s32 %v311, %v315
        %v317 = vshll.u32 %v315, 24
        %v318 = vshrl.u32 %v315, 8
        %v319 = vor.u32 %v317, %v318
        %v320 = vxor.u32 %v316, %v319
        %v321 = vadd.s32 %v316, %v228
        %v322 = vadd.s32 %v320, %v230
        %v323 = vadd.s32 %v322, 4
        %v324 = vadd.s32 %v321, %v323
        %v325 = vshll.u32 %v323, 13
        %v326 = vshrl.u32 %v323, 19
        %v327 = vor.u32 %v325, %v326
        %v328 = vxor.u32 %v324, %v327
        %v329 = vadd.s32 %v324, %v328
        %v330 = vshll.u32 %v328, 15
        %v331 = vshrl.u32 %v328, 17
        %v332 = vor.u32 %v330, %v331
        %v333 = vxor.u32 %v329, %v332
        %v334 = vadd.s32 %v329, %v333
        %v335 = vshll.u32 %v333, 26
        %v336 = vshrl.u32 %v333, 6
        %v337 = vor.u32 %v335, %v336
        %v338 = vxor.u32 %v334, %v337
        %v339 = vadd.s32 %v334, %v338
        %v340 = vshll.u32 %v338, 6
        %v341 = vshrl.u32 %v338, 26
        %v342 = vor.u32 %v340, %v341
        %v343 = vxor.u32 %v339, %v342
        %v344 = vadd.s32 %v339, %v230
        %v345 = vadd.s32 %v343, %v228
        %v346 = vadd.s32 %v345, 5
        %v347 = vxor.u32 %v344, %v346
        %348 = set.rngseed %v347
        %v349 = vrng
        %v350 = vrng
        %v351 = vshrl.u32 %v349, 9
        %v352 = vshrl.u32 %v350, 9
        %v353 = vor.u32 %v351, 1065353216
        %v354 = vor.u32 %v352, 1065353216
        %v357 = vsub.f32 %v353, 1.0
        %v358 = vsub.f32 %v354, 1.0
        %v359 = vmul.f32 %v357, 2.0
        %v360 = vmul.f32 %v358, 2.0
        %v361 = vadd.f32 %v359, -0.99999994
        %v362 = vadd.f32 %v360, -0.99999994
        %v363 = vmax.f32 %v361, -0.99999994
        %v364 = vmax.f32 %v362, -0.99999994
        %v365 = vsub.f32 0.0, %v363
        %v366 = vsub.f32 0.0, %v364
        %v367 = vmul.f32 %v363, %v365
        %v368 = vmul.f32 %v364, %v366
        %v369 = vadd.f32 %v367, 1.0
        %v370 = vlog2.pop %v369
        %v371 = vmul.f32 %v370, 0.6931472
        %v372 = vmul.f32 -0.5, %v367
        %v373 = vadd.f32 %v372, 1.0
        %v374 = vmul.f32 %v373, %v367
        %v375 = vand.u32 2147483647, %v367
        %vm376 = vcmp.lt.f32.partialorder %v375, 0.0004427343
        %v377 = vsel %vm376, %v374, %v371
        %v378 = vadd.f32 %v368, 1.0
        %v379 = vlog2.pop %v378
        %v380 = vmul.f32 %v379, 0.6931472
        %v381 = vmul.f32 -0.5, %v368
        %v382 = vadd.f32 %v381, 1.0
        %v383 = vmul.f32 %v382, %v368
        %v384 = vand.u32 2147483647, %v368
        %vm385 = vcmp.lt.f32.partialorder %v384, 0.0004427343
        %v386 = vsel %vm385, %v383, %v380
        %v387 = vsub.f32 0.0, %v377
        %v388 = vsub.f32 0.0, %v386
        %vm389 = vcmp.lt.f32.partialorder %v387, 5.0
        %vm390 = vcmp.lt.f32.partialorder %v388, 5.0
        %v391 = vsub.f32 %v387, 2.5
        %v392 = vsub.f32 %v388, 2.5
        %v393 = vrsqrt.pop %v387
        %v394 = vmul.f32 %v393, %v387
        %v395 = vmul.f32 %v394, %v393
        %v396 = vmul.f32 0.5, %v395
        %v397 = vsub.f32 1.5, %v396
        %v398 = vmul.f32 %v393, %v397
        %v399 = vmul.f32 %v387, %v398
        %vm400 = vcmp.eq.f32.partialorder %v387, inf
        %v401 = vsel %vm400, %v387, %v399
        %vm402 = vcmp.eq.f32.partialorder %v387, 0.0
        %v403 = vand.u32 %v387, 2147483648
        %v404 = vsel %vm402, %v403, %v401
        %v405 = vrsqrt.pop %v388
        %v406 = vmul.f32 %v405, %v388
        %v407 = vmul.f32 %v406, %v405
        %v408 = vmul.f32 0.5, %v407
        %v409 = vsub.f32 1.5, %v408
        %v410 = vmul.f32 %v405, %v409
        %v411 = vmul.f32 %v388, %v410
        %vm412 = vcmp.eq.f32.partialorder %v388, inf
        %v413 = vsel %vm412, %v388, %v411
        %vm414 = vcmp.eq.f32.partialorder %v388, 0.0
        %v415 = vand.u32 %v388, 2147483648
        %v416 = vsel %vm414, %v415, %v413
        %v417 = vsub.f32 %v404, 3.0
        %v418 = vsub.f32 %v416, 3.0
        %v419 = vsel %vm389, %v391, %v417
        %v420 = vsel %vm390, %v392, %v418
        %v421 = vsel %vm389, 2.8102264e-08, -0.00020021426
        %v422 = vsel %vm390, 2.8102264e-08, -0.00020021426
        %v423 = vsel %vm389, 3.4327394e-07, 0.00010095056
        %v424 = vsel %vm390, 3.4327394e-07, 0.00010095056
        %v425 = vmul.f32 %v421, %v419
        %v426 = vmul.f32 %v422, %v420
        %v427 = vadd.f32 %v423, %v425
        %v428 = vadd.f32 %v424, %v426
        %v429 = vsel %vm389, -3.5233877e-06, 0.0013493432
        %v430 = vsel %vm390, -3.5233877e-06, 0.0013493432
        %v431 = vmul.f32 %v427, %v419
        %v432 = vmul.f32 %v428, %v420
        %v433 = vadd.f32 %v429, %v431
        %v434 = vadd.f32 %v430, %v432
        %v435 = vsel %vm389, -4.3915065e-06, -0.0036734284
        %v436 = vsel %vm390, -4.3915065e-06, -0.0036734284
        %v437 = vmul.f32 %v433, %v419
        %v438 = vmul.f32 %v434, %v420
        %v439 = vadd.f32 %v435, %v437
        %v440 = vadd.f32 %v436, %v438
        %v441 = vsel %vm389, 0.00021858087, 0.0057395077
        %v442 = vsel %vm390, 0.00021858087, 0.0057395077
        %v443 = vmul.f32 %v439, %v419
        %v444 = vmul.f32 %v440, %v420
        %v445 = vadd.f32 %v441, %v443
        %v446 = vadd.f32 %v442, %v444
        %v447 = vsel %vm389, -0.001253725, -0.0076224613
        %v448 = vsel %vm390, -0.001253725, -0.0076224613
        %v449 = vmul.f32 %v445, %v419
        %v450 = vmul.f32 %v446, %v420
        %v451 = vadd.f32 %v447, %v449
        %v452 = vadd.f32 %v448, %v450
        %v453 = vsel %vm389, -0.0041776816, 0.0094388705
        %v454 = vsel %vm390, -0.0041776816, 0.0094388705
        %v455 = vmul.f32 %v451, %v419
        %v456 = vmul.f32 %v452, %v420
        %v457 = vadd.f32 %v453, %v455
        %v458 = vadd.f32 %v454, %v456
        %v459 = vsel %vm389, 0.24664073, 1.001674
        %v460 = vsel %vm390, 0.24664073, 1.001674
        %v461 = vmul.f32 %v457, %v419
        %v462 = vmul.f32 %v458, %v420
        %v463 = vadd.f32 %v459, %v461
        %v464 = vadd.f32 %v460, %v462
        %v465 = vsel %vm389, 1.5014094, 2.8329768
        %v466 = vsel %vm390, 1.5014094, 2.8329768
        %v467 = vmul.f32 %v463, %v419
        %v468 = vmul.f32 %v464, %v420
        %v469 = vadd.f32 %v465, %v467
        %v470 = vadd.f32 %v466, %v468
        %v471 = vand.u32 2147483647, %v363
        %v472 = vand.u32 2147483647, %v364
        %vm473 = vcmp.eq.f32.partialorder %v471, 1.0
        %vm474 = vcmp.eq.f32.partialorder %v472, 1.0
        %v475 = vmul.f32 %v363, inf
        %v476 = vmul.f32 %v364, inf
        %v477 = vmul.f32 %v469, %v363
        %v478 = vmul.f32 %v470, %v364
        %v479 = vsel %vm473, %v475, %v477
        %v480 = vsel %vm474, %v476, %v478
        %v481 = vmul.f32 %v479, 1.4142135
        %v482 = vmul.f32 %v480, 1.4142135
        %v483 = vld [vmem:[%s198] sm:$0xff]
        %s484 = sld [smem:[#allocation2]]
        %v485 = vstv %s484
        %v486 = vmul.f32 %v485, %v481
        %v487 = vmul.f32 %v485, %v482
        %v488 = vperm.slane %v486, 0
        %v489 = vperm.slane %v487, 0
        %v492 = vrot.slane %v489, 4
        %vm493 = vcmask 1043456
        %v494 = vsel %vm493, %v488, %v492
        %v496 = vadd.f32 %v483, %v494
        %497 = vst [vmem:[%s221] sm:$0xff] %v496
        %s498 = sand.u32 %s125, 1
        %s499 = scalar_lea.sflag [#allocation6], %s498
        %s500 = sand.u32 %s125, 1
        %s501 = smul.addr %s500, 8
        %s502 = scalar_lea.vmem [#allocation7], %s501
        // Predicated region
        $region37: #{tpu_custom_call.1} parent=31 // pred_check
          %p503 = pneg %p135
        $region38: #{tpu_custom_call.1} parent=31 // pred_check_branch
          %505 = sbr.rel (%p503) target = $region40
        $region39: #{tpu_custom_call.1} parent=31 // pred_region
          %s506 = smul.u32 2, %s28
          %508 = vsyncadd %s499, 0
          %s509 = smul.addr %s29, 2
          %s510 = sadd.s32 %s506, %s509
          %s511 = smul.addr %s27, 2
          %s512 = sadd.s32 %s510, %s511
          %s513 = smul.addr %s512, 4
          %s514 = scalar_lea.hbm %s3, %s513
          %s516 = sshll.u32 %s502, 4
          %s517 = int_to_ptr.vmem [resolvable:$true] %s516
          %s518 = sshll.u32 %s514, 4
          %s519 = int_to_ptr.hbm [resolvable:$true] %s518
          %521 = dma.vmem_to_hbm [thread:$0]  %s517, 128, %s519, %s499
        $region40: #{tpu_custom_call.1} parent=31 // pred_fallthru
          _
      $region32: #{tpu_custom_call.1} parent=5 // pred_fallthru
        _
      %p522 = scmp.le.s32.totalorder 2, %s17
      // Predicated region
      $region41: #{tpu_custom_call.1} parent=5 // pred_check
        %p523 = pneg %p522
      $region42: #{tpu_custom_call.1} parent=5 // pred_check_branch
        %525 = sbr.rel (%p523) target = $region44
      $region43: #{tpu_custom_call.1} parent=5 // pred_region
        %s526 = ssub.s32 %s17, 2
        // Predicated region
        $region45: #{tpu_custom_call.1} parent=43 // pred_check
          %p527 = pneg %p141
        $region46: #{tpu_custom_call.1} parent=43 // pred_check_branch
          %529 = sbr.rel (%p527) target = $region48
        $region47: #{tpu_custom_call.1} parent=43 // pred_region
          %s530 = sand.u32 %s126, 1
          %s531 = scalar_lea.sflag [#allocation6], %s530
          %s532 = sand.u32 %s126, 1
          %s533 = smul.addr %s532, 8
          %s534 = scalar_lea.vmem [#allocation7], %s533
          %536 = dma.done %s531, 128
        $region48: #{tpu_custom_call.1} parent=43 // pred_fallthru
          _
      $region44: #{tpu_custom_call.1} parent=5 // pred_fallthru
        _
    $region6: #{tpu_custom_call.1} parent=1 // loop_footer
      %s21 = sadd.s32 1, %s17
    $region7: #{tpu_custom_call.1} parent=1 // loop_footer_branch
      %16 = sbr.rel target = $region3
    $region8: #{tpu_custom_call.1} parent=1 // loop_exit
      _
    %537 = vsyncpa [#allocation5], 1
    %s538 = scalar_lea.sflag [#allocation5], 1
    %539 = vsyncpa %s538, 1
    %540 = vsyncpa [#allocation6], 1
    %s541 = scalar_lea.sflag [#allocation6], 1
    %542 = vsyncpa %s541, 1

// kernel: tpu_custom_call.1
$region0: #{tpu_custom_call.1}
  #allocation0 [shape = 'u32[]', space=smem, size = 0x4, offset = 0x4, fixed_abs, tag = 'smem constant byte address 0x4 - core index']
  #allocation1 [shape = 'u32[72,128]{1,0:T(1,128)}', space=vmem, size = 0x9000, scoped, tag = 'internal scratch']
  #allocation2 [shape = 'f32[1]{0:T(128)S(6)}', space=smem, size = 0x200, scoped, tag = 'scoped memory for tpu_custom_call.1']
  %s0 = inlined_call_operand.<no memory space> [shape: f32[1], index: 0, kind: input, shape index: {}]
  %s1 = inlined_call_operand.hbm [shape: f32[2,4,256], index: 1, kind: input, shape index: {}, may-alias: {1,3}]
  %s2 = inlined_call_operand.vmem [shape: f32[2,1,256], index: 2, kind: input, shape index: {}]
  %s3 = inlined_call_operand.hbm [shape: f32[2,4,256], index: 3, kind: output, shape index: {}, may-alias: {1,3}]
  %s4 = sld [smem:[#allocation0]]
  $region49: #{tpu_custom_call.1} parent=0
    _
  %s6 = ssub.s32 1, %s4
  %s7 = scalar_select 0, %s6, %s4
  %8 = sst [smem:[#allocation2]] %s0
  $region1: #{tpu_custom_call.1} parent=0
    #allocation3 [shape = 'u8[8192]{0}', space=vmem, size = 0x2000, scoped, tag = 'input window, operand 1']
    #allocation4 [shape = 's32[2]{0}', space=sflag, size = 0x8, scoped, tag = 'scoped memory for tpu_custom_call.1']
    #allocation5 [shape = 's32[2]{0}', space=sflag, size = 0x8, scoped, tag = 'scoped memory for tpu_custom_call.1']
    #allocation6 [shape = 'u8[8192]{0}', space=vmem, size = 0x2000, scoped, tag = 'output window, operand 0']
    %9 = vsyncpa [#allocation4], 0
    %s10 = scalar_lea.sflag [#allocation4], 1
    %11 = vsyncpa %s10, 0
    %12 = vsyncpa [#allocation5], 0
    %s13 = scalar_lea.sflag [#allocation5], 1
    %14 = vsyncpa %s13, 0
    loop: start=0, step=1, limit=4
    $region2: #{tpu_custom_call.1} parent=1 // loop_pre_header
      _
    $region3: #{tpu_custom_call.1} parent=1 // loop_header
      %s16 = sphi 0, %s20
      %p17 = scmp.ge.s32.totalorder %s16, 4
      %s23 = sphi 0, %s42
      %s24 = sphi 0, %s38
      %s25 = sphi 0, %s34
      %s26 = sphi 0, %s23
      %s27 = sphi 0, %s24
      %s28 = sphi 0, %s25
      %s29 = sphi 0, %s26
      %s30 = sphi 0, %s27
      %s31 = sphi 0, %s28
      %s43 = sphi 0, %s43
      %s45 = sphi 0, %s43
      %s46 = sphi 0, %s45
      %s60 = sphi 0, %s46
      %s70 = sphi 0, %s72
      %s73 = sphi 0, %s70
      %s74 = sphi 0, %s73
      %s90 = sphi 0, %s74
      %s98 = sphi 0, %s100
      %s101 = sphi 0, %s98
      %s102 = sphi 0, %s101
      %s118 = sphi 0, %s102
      %s128 = sphi 0, %s130
      %s131 = sphi 0, %s128
      %s132 = sphi 0, %s131
      %s148 = sphi 0, %s132
    $region4: #{tpu_custom_call.1} parent=1 // loop_header_branch
      %19 = sbr.rel (%p17) target = $region8
    $region5: #{tpu_custom_call.1} parent=1 // loop_body
      %s21 = ssub.s32 %s16, 1
      %s22 = ssub.s32 %s16, 2
      %s32 = sadd.s32 1, %s25
      %p33 = scmp.ge.s32.totalorder %s32, 1
      %s34 = scalar_select %p33, 0, %s32
      %s35 = sadd.s32 1, %s24
      %s36 = scalar_select %p33, %s35, %s24
      %p37 = scmp.ge.s32.totalorder %s36, 1
      %s38 = scalar_select %p37, 0, %s36
      %s39 = sadd.s32 1, %s23
      %s40 = scalar_select %p37, %s39, %s23
      %p41 = scmp.ge.s32.totalorder %s40, 2
      %s42 = scalar_select %p41, 0, %s40
      %s44 = sadd.s32 %s43, 1
      %p47 = scmp.eq.s32.totalorder %s16, 1
      %p48 = scmp.ne.s32.totalorder %s43, %s45
      %p49 = scmp.eq.s32.totalorder %s16, 0
      %p50 = por %p48, %p49
      %p51 = scmp.ne.s32.totalorder %s43, %s45
      %p52 = scmp.eq.s32.totalorder %s21, 1
      %p53 = por %p51, %p52
      %p54 = scmp.ne.s32.totalorder %s45, %s46
      %p55 = scmp.eq.s32.totalorder %s21, 0
      %p56 = por %p54, %p55
      %p57 = scmp.ne.s32.totalorder %s45, %s46
      %p58 = scmp.eq.s32.totalorder %s22, 1
      %p59 = por %p57, %p58
      %p61 = scmp.ne.s32.totalorder %s46, %s60
      %p62 = scmp.eq.s32.totalorder %s22, 0
      %p63 = por %p61, %p62
      %s64 = ssub.s32 %s23, %s42
      %s65 = ssub.s32 %s25, %s34
      %s66 = sor.u32 %s64, %s65
      %s67 = ssub.s32 %s24, %s38
      %s68 = sor.u32 %s66, %s67
      %p69 = scmp.eq.s32.totalorder %s68, 0
      %s71 = sadd.s32 %s70, 1
      %s72 = scalar_select %p69, %s70, %s71
      %p75 = pneg %p69
      %p76 = scmp.eq.s32.totalorder %s16, 1
      %p77 = por %p75, %p76
      %p78 = scmp.ne.s32.totalorder %s70, %s73
      %p79 = scmp.eq.s32.totalorder %s16, 0
      %p80 = por %p78, %p79
      %p81 = scmp.ne.s32.totalorder %s70, %s73
      %p82 = scmp.eq.s32.totalorder %s21, 1
      %p83 = por %p81, %p82
      %p84 = scmp.ne.s32.totalorder %s73, %s74
      %p85 = scmp.eq.s32.totalorder %s21, 0
      %p86 = por %p84, %p85
      %p87 = scmp.ne.s32.totalorder %s73, %s74
      %p88 = scmp.eq.s32.totalorder %s22, 1
      %p89 = por %p87, %p88
      %p91 = scmp.ne.s32.totalorder %s74, %s90
      %p92 = scmp.eq.s32.totalorder %s22, 0
      %p93 = por %p91, %p92
      %s94 = ssub.s32 %s23, %s42
      %s95 = ssub.s32 %s24, %s38
      %s96 = sor.u32 %s94, %s95
      %p97 = scmp.eq.s32.totalorder %s96, 0
      %s99 = sadd.s32 %s98, 1
      %s100 = scalar_select %p97, %s98, %s99
      %p103 = pneg %p97
      %p104 = scmp.eq.s32.totalorder %s16, 1
      %p105 = por %p103, %p104
      %p106 = scmp.ne.s32.totalorder %s98, %s101
      %p107 = scmp.eq.s32.totalorder %s16, 0
      %p108 = por %p106, %p107
      %p109 = scmp.ne.s32.totalorder %s98, %s101
      %p110 = scmp.eq.s32.totalorder %s21, 1
      %p111 = por %p109, %p110
      %p112 = scmp.ne.s32.totalorder %s101, %s102
      %p113 = scmp.eq.s32.totalorder %s21, 0
      %p114 = por %p112, %p113
      %p115 = scmp.ne.s32.totalorder %s101, %s102
      %p116 = scmp.eq.s32.totalorder %s22, 1
      %p117 = por %p115, %p116
      %p119 = scmp.ne.s32.totalorder %s102, %s118
      %p120 = scmp.eq.s32.totalorder %s22, 0
      %p121 = por %p119, %p120
      %s122 = ssub.s32 %s23, %s42
      %s123 = ssub.s32 %s25, %s34
      %s124 = sor.u32 %s122, %s123
      %s125 = ssub.s32 %s24, %s38
      %s126 = sor.u32 %s124, %s125
      %p127 = scmp.eq.s32.totalorder %s126, 0
      %s129 = sadd.s32 %s128, 1
      %s130 = scalar_select %p127, %s128, %s129
      %p133 = pneg %p127
      %p134 = scmp.eq.s32.totalorder %s16, 1
      %p135 = por %p133, %p134
      %p136 = scmp.ne.s32.totalorder %s128, %s131
      %p137 = scmp.eq.s32.totalorder %s16, 0
      %p138 = por %p136, %p137
      %p139 = scmp.ne.s32.totalorder %s128, %s131
      %p140 = scmp.eq.s32.totalorder %s21, 1
      %p141 = por %p139, %p140
      %p142 = scmp.ne.s32.totalorder %s131, %s132
      %p143 = scmp.eq.s32.totalorder %s21, 0
      %p144 = por %p142, %p143
      %p145 = scmp.ne.s32.totalorder %s131, %s132
      %p146 = scmp.eq.s32.totalorder %s22, 1
      %p147 = por %p145, %p146
      %p149 = scmp.ne.s32.totalorder %s132, %s148
      %p150 = scmp.eq.s32.totalorder %s22, 0
      %p151 = por %p149, %p150
      %p152 = scmp.le.s32.totalorder 1, %s16
      %p153 = scmp.lt.s32.totalorder %s16, 3
      %p154 = pnand %p152, %p153
      %p155 = pneg %p154
      // Predicated region
      $region9: #{tpu_custom_call.1} parent=5 // pred_check
        _
      $region10: #{tpu_custom_call.1} parent=5 // pred_check_branch
        %157 = sbr.rel (%p154) target = $region12
      $region11: #{tpu_custom_call.1} parent=5 // pred_region
        %s158 = ssub.s32 %s16, 1
        // Predicated region
        $region13: #{tpu_custom_call.1} parent=11 // pred_check
          %p159 = pneg %p56
        $region14: #{tpu_custom_call.1} parent=11 // pred_check_branch
          %161 = sbr.rel (%p159) target = $region16
        $region15: #{tpu_custom_call.1} parent=11 // pred_region
          _
        $region16: #{tpu_custom_call.1} parent=11 // pred_fallthru
          _
      $region12: #{tpu_custom_call.1} parent=5 // pred_fallthru
        _
      %p162 = scmp.lt.s32.totalorder %s16, 2
      // Predicated region
      $region17: #{tpu_custom_call.1} parent=5 // pred_check
        %p163 = pneg %p162
      $region18: #{tpu_custom_call.1} parent=5 // pred_check_branch
        %165 = sbr.rel (%p163) target = $region20
      $region19: #{tpu_custom_call.1} parent=5 // pred_region
        // Predicated region
        $region21: #{tpu_custom_call.1} parent=19 // pred_check
          %p166 = pneg %p80
        $region22: #{tpu_custom_call.1} parent=19 // pred_check_branch
          %168 = sbr.rel (%p166) target = $region24
        $region23: #{tpu_custom_call.1} parent=19 // pred_region
          %s169 = sand.u32 %s70, 1
          %s170 = scalar_lea.sflag [#allocation4], %s169
          %s171 = sand.u32 %s70, 1
          %s172 = smul.addr %s171, 8
          %s173 = scalar_lea.vmem [#allocation3], %s172
          %s174 = smul.u32 2, %s24
          %176 = vsyncadd %s170, 0
          %s177 = smul.addr %s25, 2
          %s178 = sadd.s32 %s174, %s177
          %s179 = smul.addr %s23, 2
          %s180 = sadd.s32 %s178, %s179
          %s181 = smul.addr %s180, 4
          %s182 = scalar_lea.hbm %s1, %s181
          %s184 = sshll.u32 %s182, 4
          %s185 = int_to_ptr.hbm [resolvable:$true] %s184
          %s186 = sshll.u32 %s173, 4
          %s187 = int_to_ptr.vmem [resolvable:$true] %s186
          %189 = dma.hbm_to_vmem [thread:$0]  %s185, 128, %s187, %s170
        $region24: #{tpu_custom_call.1} parent=19 // pred_fallthru
          _
        // Predicated region
        $region25: #{tpu_custom_call.1} parent=19 // pred_check
          %p190 = pneg %p108
        $region26: #{tpu_custom_call.1} parent=19 // pred_check_branch
          %192 = sbr.rel (%p190) target = $region28
        $region27: #{tpu_custom_call.1} parent=19 // pred_region
          %s193 = smul.u32 2, %s24
          %p194 = scmp.lt.s32.totalorder %s23, 1
          %s195 = scalar_select %p194, %s23, 1
          %p196 = scmp.lt.s32.totalorder %s193, 1
          %s197 = scalar_select %p196, %s193, 1
          %s198 = smul.addr %s195, 2
          %s199 = sadd.s32 %s197, %s198
          %s200 = scalar_lea.vmem %s2, %s199
          %s201 = smul.u32 2, %s24
        $region28: #{tpu_custom_call.1} parent=19 // pred_fallthru
          _
      $region20: #{tpu_custom_call.1} parent=5 // pred_fallthru
        _
      %p202 = scmp.le.s32.totalorder 1, %s16
      %p203 = scmp.lt.s32.totalorder %s16, 3
      %p204 = pnand %p202, %p203
      %p205 = pneg %p204
      // Predicated region
      $region29: #{tpu_custom_call.1} parent=5 // pred_check
        _
      $region30: #{tpu_custom_call.1} parent=5 // pred_check_branch
        %207 = sbr.rel (%p204) target = $region32
      $region31: #{tpu_custom_call.1} parent=5 // pred_region
        %s208 = ssub.s32 %s16, 1
        %s209 = sand.u32 %s73, 1
        %s210 = scalar_lea.sflag [#allocation4], %s209
        %s211 = sand.u32 %s73, 1
        %s212 = smul.addr %s211, 8
        %s213 = scalar_lea.vmem [#allocation3], %s212
        // Predicated region
        $region33: #{tpu_custom_call.1} parent=31 // pred_check
          %p214 = pneg %p86
        $region34: #{tpu_custom_call.1} parent=31 // pred_check_branch
          %216 = sbr.rel (%p214) target = $region36
        $region35: #{tpu_custom_call.1} parent=31 // pred_region
          %218 = dma.done %s210, 128
        $region36: #{tpu_custom_call.1} parent=31 // pred_fallthru
          _
        %p219 = pneg %p56
        %p220 = pneg %p53
        %s221 = sand.u32 %s73, 1
        %s222 = scalar_lea.sflag [#allocation4], %s221
        %s223 = sand.u32 %s73, 1
        %s224 = smul.addr %s223, 8
        %s225 = scalar_lea.vmem [#allocation3], %s224
        %p226 = pneg %p86
        %p227 = pneg %p83
        %s228 = smul.u32 2, %s27
        %p229 = scmp.lt.s32.totalorder %s26, 1
        %s230 = scalar_select %p229, %s26, 1
        %p231 = scmp.lt.s32.totalorder %s228, 1
        %s232 = scalar_select %p231, %s228, 1
        %s233 = smul.addr %s230, 2
        %s234 = sadd.s32 %s232, %s233
        %s235 = scalar_lea.vmem %s2, %s234
        %p236 = pneg %p114
        %p237 = pneg %p111
        %p238 = pneg %p144
        %p239 = pneg %p141
        %s240 = sand.u32 %s131, 1
        %s241 = scalar_lea.sflag [#allocation5], %s240
        %s242 = sand.u32 %s131, 1
        %s243 = smul.addr %s242, 8
        %s244 = scalar_lea.vmem [#allocation6], %s243
        %s245 = smul.u32 2, %s27
        %s246 = smul.u32 2, %s27
        %p247 = scmp.lt.s32.totalorder %s26, 1
        %s248 = scalar_select %p247, %s26, 1
        %p249 = scmp.lt.s32.totalorder %s246, 1
        %s250 = scalar_select %p249, %s246, 1
        %s251 = smul.addr %s248, 2
        %s252 = sadd.s32 %s250, %s251
        %s253 = scalar_lea.vmem %s2, %s252
        %s254 = smul.u32 2, %s27
        %s255 = smul.u32 2, %s27
        %v256 = vld [vmem:[%s213] sm:$0xff]
        %v257 = vld [vmem:[%s253] sm:$0x3]
        %s258 = sld [smem:[#allocation2]]
        %v259 = vstv %s258
        %v260 = vmul.f32 %v259, %v257
        %v262 = vperm.slane %v260, 0
        %v263 = vperm.slane %v260, 1
        %v264 = vrot.slane %v263, 4
        %vm265 = vcmask 1043456
        %v266 = vsel %vm265, %v262, %v264
        %v268 = vadd.f32 %v256, %v266
        %269 = vst [vmem:[%s244] sm:$0xff] %v268
        %s270 = sand.u32 %s131, 1
        %s271 = scalar_lea.sflag [#allocation5], %s270
        %s272 = sand.u32 %s131, 1
        %s273 = smul.addr %s272, 8
        %s274 = scalar_lea.vmem [#allocation6], %s273
        // Predicated region
        $region37: #{tpu_custom_call.1} parent=31 // pred_check
          %p275 = pneg %p141
        $region38: #{tpu_custom_call.1} parent=31 // pred_check_branch
          %277 = sbr.rel (%p275) target = $region40
        $region39: #{tpu_custom_call.1} parent=31 // pred_region
          %s278 = smul.u32 2, %s27
          %280 = vsyncadd %s271, 0
          %s281 = smul.addr %s28, 2
          %s282 = sadd.s32 %s278, %s281
          %s283 = smul.addr %s26, 2
          %s284 = sadd.s32 %s282, %s283
          %s285 = smul.addr %s284, 4
          %s286 = scalar_lea.hbm %s3, %s285
          %s288 = sshll.u32 %s274, 4
          %s289 = int_to_ptr.vmem [resolvable:$true] %s288
          %s290 = sshll.u32 %s286, 4
          %s291 = int_to_ptr.hbm [resolvable:$true] %s290
          %293 = dma.vmem_to_hbm [thread:$0]  %s289, 128, %s291, %s271
        $region40: #{tpu_custom_call.1} parent=31 // pred_fallthru
          _
      $region32: #{tpu_custom_call.1} parent=5 // pred_fallthru
        _
      %p294 = scmp.le.s32.totalorder 2, %s16
      // Predicated region
      $region41: #{tpu_custom_call.1} parent=5 // pred_check
        %p295 = pneg %p294
      $region42: #{tpu_custom_call.1} parent=5 // pred_check_branch
        %297 = sbr.rel (%p295) target = $region44
      $region43: #{tpu_custom_call.1} parent=5 // pred_region
        %s298 = ssub.s32 %s16, 2
        // Predicated region
        $region45: #{tpu_custom_call.1} parent=43 // pred_check
          %p299 = pneg %p147
        $region46: #{tpu_custom_call.1} parent=43 // pred_check_branch
          %301 = sbr.rel (%p299) target = $region48
        $region47: #{tpu_custom_call.1} parent=43 // pred_region
          %s302 = sand.u32 %s132, 1
          %s303 = scalar_lea.sflag [#allocation5], %s302
          %s304 = sand.u32 %s132, 1
          %s305 = smul.addr %s304, 8
          %s306 = scalar_lea.vmem [#allocation6], %s305
          %308 = dma.done %s303, 128
        $region48: #{tpu_custom_call.1} parent=43 // pred_fallthru
          _
      $region44: #{tpu_custom_call.1} parent=5 // pred_fallthru
        _
    $region6: #{tpu_custom_call.1} parent=1 // loop_footer
      %s20 = sadd.s32 1, %s16
    $region7: #{tpu_custom_call.1} parent=1 // loop_footer_branch
      %15 = sbr.rel target = $region3
    $region8: #{tpu_custom_call.1} parent=1 // loop_exit
      _
    %309 = vsyncpa [#allocation4], 1
    %s310 = scalar_lea.sflag [#allocation4], 1
    %311 = vsyncpa %s310, 1
    %312 = vsyncpa [#allocation5], 1
    %s313 = scalar_lea.sflag [#allocation5], 1
    %314 = vsyncpa %s313, 1

</llo_original>
